<compile_context>
chip_gen: v6e
topology: v6e:2x2x1
jax: 0.10.0
libtpu: 0.0.40
codegen_flags: <defaults>
</compile_context>

<pallas_src>
import jax
import jax.numpy as jnp
from jax.experimental import pallas as pl
from jax.experimental.pallas import tpu as pltpu  # noqa: F401  (TPU backend)

NDIM = 32      # ndim (input channels)
RANK = 32      # adapter rank
SEQ = 16       # sequence length L
OUT_CH = 30    # conv1d out_channels
BATCH = 2


# --------------------------------------------------------------------------- #
# Kernel: one matmul + one VPU add, no grid, full-array blocks.
# --------------------------------------------------------------------------- #
def adaptor_kernel(x_ref, wb_ref, o_ref):
    # x_ref : (B, D, L)           NCL activation (whole array, single call)
    # wb_ref: (OUT_CH, D + B*L)   [ W_eff^T | bias pre-broadcast over B*L ]
    # o_ref : (B, OUT_CH, L)
    B, D, L = x_ref.shape
    w = wb_ref[:, :D]                                   # (OUT_CH, D)
    b = wb_ref[:, D:]                                   # (OUT_CH, B*L)
    # Lane-concat the (tiny, static) batch into a single rhs -> one MXU push.
    xcat = jnp.concatenate([x_ref[i] for i in range(B)], axis=1)   # (D, B*L)
    y = jnp.dot(w, xcat, preferred_element_type=jnp.float32) + b   # (OUT_CH, B*L)
    y = y.astype(o_ref.dtype)
    for i in range(B):                                  # static unroll, B small
        o_ref[i] = y[:, i * L:(i + 1) * L]


# --------------------------------------------------------------------------- #
# One-time (load-time) weight fold + packing.  NOT on the per-call hot path.
# --------------------------------------------------------------------------- #
def fold_adaptor_weights(wd_t, bd, wu_t, bu, wc_t, *, batch, seq,
                         out_dtype=jnp.float32, training=False):
    """Fold the adapter (eval mode) into a single packed (OUT_CH, D+B*L) operand.

    wd_t: (D, R) down_proj.weight^T     bd: (1, R) down_proj.bias
    wu_t: (R, D) up_proj.weight^T       bu: (1, D) up_proj.bias
    wc_t: (D, OUT_CH) conv.weight (k=1, no bias), squeezed & transposed
    """
    if training:
        # TODO(synk): training-mode dropout(p=0.1) invalidates the fold; an
        # unfused 3-matmul kernel with pltpu.prng_* masking would be needed.
        raise NotImplementedError("Adaptor fold is only valid in eval mode.")
    f32 = jnp.float32
    wd_t, bd, wu_t, bu, wc_t = (a.astype(f32) for a in (wd_t, bd, wu_t, bu, wc_t))
    D = wd_t.shape[0]
    out_ch = wc_t.shape[1]
    w_eff = (wd_t @ wu_t + jnp.eye(D, dtype=f32)) @ wc_t      # (D, OUT_CH)
    b_eff = (bd @ wu_t + bu) @ wc_t                           # (1, OUT_CH)
    b_bcast = jnp.broadcast_to(b_eff.T, (out_ch, batch * seq))  # (OUT_CH, B*L)
    wb = jnp.concatenate([w_eff.T, b_bcast], axis=1)          # (OUT_CH, D+B*L)
    return wb.astype(out_dtype)


# --------------------------------------------------------------------------- #
# Hot path: single pallas_call, two operands, no grid.
# --------------------------------------------------------------------------- #
@jax.jit
def adaptor_forward(x_ncl, wb_packed):
    """x_ncl: (B, D, L) NCL like the PyTorch module.  Returns (B, OUT_CH, L)."""
    B, D, L = x_ncl.shape
    out_ch = wb_packed.shape[0]
    return pl.pallas_call(
        adaptor_kernel,
        out_shape=jax.ShapeDtypeStruct((B, out_ch, L), x_ncl.dtype),
        in_specs=[
            pl.BlockSpec((B, D, L), lambda: (0, 0, 0)),        # x (whole array)
            pl.BlockSpec(wb_packed.shape, lambda: (0, 0)),     # packed W|bias
        ],
        out_specs=pl.BlockSpec((B, out_ch, L), lambda: (0, 0, 0)),
    )(x_ncl, wb_packed)


# --------------------------------------------------------------------------- #
# Pure-JAX reference mirroring the PyTorch forward (unfused, eval mode).
# --------------------------------------------------------------------------- #
def reference_forward(x_ncl, wd_t, bd, wu_t, bu, wc_t):
    xt = jnp.transpose(x_ncl, (0, 2, 1))          # (B, L, D)
    down = xt @ wd_t + bd                         # (B, L, R)
    up = down @ wu_t + bu                         # (B, L, D)
    s = up + xt                                   # residual (dropout = identity)
    out = s @ wc_t                                # conv1d(k=1) == channel matmul
    return jnp.transpose(out, (0, 2, 1))          # (B, OUT_CH, L)


if __name__ == "__main__":
    key = jax.random.PRNGKey(0)
    k_x, k_wd, k_bd, k_wu, k_bu, k_wc = jax.random.split(key, 6)

    # Parameters mirroring Adaptor.__init__ shapes (ndim=32, rank=32).
    # down_proj.weight: (R, D), normal std = 1/rank -> stored transposed (D, R)
    wd = (1.0 / RANK) * jax.random.normal(k_wd, (RANK, NDIM), dtype=jnp.float32)
    wd_t = wd.T
    # down_proj.bias: (R,)
    bd = jax.random.uniform(k_bd, (1, RANK), dtype=jnp.float32,
                            minval=-1.0 / jnp.sqrt(NDIM), maxval=1.0 / jnp.sqrt(NDIM))
    # up_proj.weight: (D, R).  The module zero-initializes it; use a small
    # nonzero value so the numerical check exercises the folded low-rank path.
    wu = 0.02 * jax.random.normal(k_wu, (NDIM, RANK), dtype=jnp.float32)
    wu_t = wu.T
    # up_proj.bias: (D,)
    bu = jax.random.uniform(k_bu, (1, NDIM), dtype=jnp.float32,
                            minval=-1.0 / jnp.sqrt(RANK), maxval=1.0 / jnp.sqrt(RANK))
    # conv.weight: (30, D, 1), no bias -> squeeze & transpose to (D, 30)
    wc = 0.1 * jax.random.normal(k_wc, (OUT_CH, NDIM), dtype=jnp.float32)
    wc_t = wc.T

    # Example input, NCL layout as the PyTorch module expects: (B, ndim, L)
    x = jax.random.normal(k_x, (BATCH, NDIM, SEQ), dtype=jnp.float32)

    # One-time fold (load-time cache); NOT re-executed per forward call.
    wb_packed = jax.block_until_ready(
        fold_adaptor_weights(wd_t, bd, wu_t, bu, wc_t,
                             batch=BATCH, seq=SEQ, out_dtype=x.dtype))

    out = adaptor_forward(x, wb_packed)
    out = jax.block_until_ready(out)

    ref = reference_forward(x, wd_t, bd, wu_t, bu, wc_t)
    assert out.shape == (BATCH, OUT_CH, SEQ), out.shape
    assert jnp.allclose(out, ref, atol=1e-4, rtol=1e-4), "mismatch vs reference"

    print("KERNEL_OK")
</pallas_src>

<mosaic_0001>
module attributes {stable_mosaic.version = 11 : i64} {
  func.func @adaptor_kernel(%arg0: memref<2x32x16xf32, #tpu.memory_space<vmem>>, %arg1: memref<30x64xf32, #tpu.memory_space<vmem>>, %arg2: memref<2x30x16xf32, #tpu.memory_space<vmem>>) attributes {dimension_semantics = [], scalar_prefetch = 0 : i64, scratch_operands = 0 : i64, tpu.core_type = #tpu.core_type<tc>} {
    %c0 = arith.constant 0 : index
    %c0_0 = arith.constant 0 : index
    %0 = vector.load %arg1[%c0, %c0_0] : memref<30x64xf32, #tpu.memory_space<vmem>>, vector<30x32xf32>
    %c0_1 = arith.constant 0 : index
    %c32 = arith.constant 32 : index
    %1 = vector.load %arg1[%c0_1, %c32] : memref<30x64xf32, #tpu.memory_space<vmem>>, vector<30x32xf32>
    %c0_2 = arith.constant 0 : index
    %c0_3 = arith.constant 0 : index
    %c0_4 = arith.constant 0 : index
    %2 = vector.load %arg0[%c0_2, %c0_3, %c0_4] : memref<2x32x16xf32, #tpu.memory_space<vmem>>, vector<1x32x16xf32>
    %3 = vector.shape_cast %2 : vector<1x32x16xf32> to vector<32x16xf32>
    %c1 = arith.constant 1 : index
    %c0_5 = arith.constant 0 : index
    %c0_6 = arith.constant 0 : index
    %4 = vector.load %arg0[%c1, %c0_5, %c0_6] : memref<2x32x16xf32, #tpu.memory_space<vmem>>, vector<1x32x16xf32>
    %5 = vector.shape_cast %4 : vector<1x32x16xf32> to vector<32x16xf32>
    %6 = tpu.concatenate %3, %5 in 1 : vector<32x16xf32>, vector<32x16xf32> -> vector<32x32xf32>
    %cst = arith.constant dense<0.000000e+00> : vector<30x32xf32>
    %7 = tpu.matmul %0, %6, %cst {dimension_numbers = #tpu.dot_dimension_numbers<[1], [0], [0], [1], [0, 0, 1, 1], [], []>} : vector<30x32xf32>, vector<32x32xf32>, vector<30x32xf32> -> vector<30x32xf32>
    %8 = arith.addf %7, %1 : vector<30x32xf32>
    %9 = vector.extract_strided_slice %8 {offsets = [0, 0], sizes = [30, 16], strides = [1, 1]} : vector<30x32xf32> to vector<30x16xf32>
    %c0_7 = arith.constant 0 : index
    %c0_8 = arith.constant 0 : index
    %c0_9 = arith.constant 0 : index
    %10 = vector.load %arg2[%c0_7, %c0_8, %c0_9] : memref<2x30x16xf32, #tpu.memory_space<vmem>>, vector<1x30x16xf32>
    %11 = vector.shape_cast %10 : vector<1x30x16xf32> to vector<30x16xf32>
    %12 = vector.shape_cast %9 : vector<30x16xf32> to vector<1x30x16xf32>
    tpu.vector_store %arg2[%c0_7, %c0_8, %c0_9], %12 {strides = array<i32>} : memref<2x30x16xf32, #tpu.memory_space<vmem>>, vector<1x30x16xf32>,
    %13 = vector.extract_strided_slice %8 {offsets = [0, 16], sizes = [30, 16], strides = [1, 1]} : vector<30x32xf32> to vector<30x16xf32>
    %c1_10 = arith.constant 1 : index
    %c0_11 = arith.constant 0 : index
    %c0_12 = arith.constant 0 : index
    %14 = vector.load %arg2[%c1_10, %c0_11, %c0_12] : memref<2x30x16xf32, #tpu.memory_space<vmem>>, vector<1x30x16xf32>
    %15 = vector.shape_cast %14 : vector<1x30x16xf32> to vector<30x16xf32>
    %16 = vector.shape_cast %13 : vector<30x16xf32> to vector<1x30x16xf32>
    tpu.vector_store %arg2[%c1_10, %c0_11, %c0_12], %16 {strides = array<i32>} : memref<2x30x16xf32, #tpu.memory_space<vmem>>, vector<1x30x16xf32>,
    return
  }
}

</mosaic_0001>

<llo_original>
// kernel: adaptor_forward.1
$region0: #{adaptor_forward.1}
  #allocation0 [shape = 'u32[]', space=smem, size = 0x4, offset = 0x4, fixed_abs, tag = 'smem constant byte address 0x4 - core index']
  #allocation1 [shape = 'u32[144,128]{1,0:T(1,128)}', space=vmem, size = 0x12000, scoped, tag = 'internal scratch']
  %s0 = inlined_call_operand.vmem [shape: f32[2,32,16], index: 0, kind: input, shape index: {}]
  %s1 = inlined_call_operand.vmem [shape: f32[30,64], index: 1, kind: input, shape index: {}]
  %s2 = inlined_call_operand.vmem [shape: f32[2,30,16], index: 2, kind: output, shape index: {}]
  %s3 = sld [smem:[#allocation0]]
  $region18: #{adaptor_forward.1} parent=0
    _
  %s5 = ssub.s32 1, %s3
  %s6 = scalar_select 0, %s5, %s3
  // Predicated region
  $region2: #{adaptor_forward.1} parent=0 // pred_check
    _
  $region3: #{adaptor_forward.1} parent=0 // pred_check_branch
    %8 = sbr.rel (0) target = $region5
  $region4: #{adaptor_forward.1} parent=0 // pred_region
    _
  $region5: #{adaptor_forward.1} parent=0 // pred_fallthru
    _
  // Predicated region
  $region6: #{adaptor_forward.1} parent=0 // pred_check
    _
  $region7: #{adaptor_forward.1} parent=0 // pred_check_branch
    %10 = sbr.rel (0) target = $region9
  $region8: #{adaptor_forward.1} parent=0 // pred_region
    _
  $region9: #{adaptor_forward.1} parent=0 // pred_fallthru
    _
  %v11 = vld [vmem:[%s1] sm:$0xff]
  %v12 = vld [vmem:[%s1 + $0x8] sm:$0xff]
  %v13 = vld [vmem:[%s1 + $0x10] sm:$0xff]
  %v14 = vld [vmem:[%s1 + $0x18] sm:$0x3f]
  %v15 = vld [vmem:[%s0] sm:$0xff]
  %v16 = vld [vmem:[%s0 + $0x8] sm:$0xff]
  %v17 = vld [vmem:[%s0 + $0x10] sm:$0xff]
  %v18 = vld [vmem:[%s0 + $0x18] sm:$0xff]
  %s19 = scalar_lea.vmem %s0, 32
  %v20 = vld [vmem:[%s19] sm:$0xff]
  %v21 = vld [vmem:[%s19 + $0x8] sm:$0xff]
  %v22 = vld [vmem:[%s19 + $0x10] sm:$0xff]
  %v23 = vld [vmem:[%s19 + $0x18] sm:$0xff]
  %28 = vrot.lane.b32.xlu0 %v20, 16
  %v29 = vpop.permute.xlu0 %28
  %30 = vrot.lane.b32.xlu0 %v21, 16
  %v31 = vpop.permute.xlu0 %30
  %32 = vrot.lane.b32.xlu0 %v22, 16
  %v33 = vpop.permute.xlu0 %32
  %34 = vrot.lane.b32.xlu0 %v23, 16
  %v35 = vpop.permute.xlu0 %34
  %vm40 = vcmask 130048
  %v41 = vsel %vm40, %v15, %v29
  %v42 = vsel %vm40, %v16, %v31
  %v43 = vsel %vm40, %v17, %v33
  %v44 = vsel %vm40, %v18, %v35
  %49 = vrot.lane.b32.xlu0 %v11, 96
  %v50 = vpop.permute.xlu0 %49
  %51 = vrot.lane.b32.xlu0 %v12, 96
  %v52 = vpop.permute.xlu0 %51
  %53 = vrot.lane.b32.xlu0 %v13, 96
  %v54 = vpop.permute.xlu0 %53
  %55 = vrot.lane.b32.xlu0 %v14, 96
  %v56 = vpop.permute.xlu0 %55
  %vm61 = vcmask 261120
  %v62 = vsel %vm61, %v11, 0
  %v64 = vsel %vm61, %v12, 0
  %v66 = vsel %vm61, %v13, 0
  %v68 = vsel %vm61, %v14, 0
  %70 = vmatprep.subr.mxu0 0.0
  %71 = vmatpush1.msra.mxu0 0.0
  %72 = vmatprep.subr.mxu0 0.0
  %73 = vmatpush1.msra.mxu0 0.0
  %74 = vmatprep.subr.mxu0 0.0
  %75 = vmatpush1.msra.mxu0 0.0
  %76 = vmatprep.subr.mxu0 0.0
  %77 = vmatpush1.msra.mxu0 0.0
  %78 = vmatprep.subr.mxu0 0.0
  %79 = vmatpush1.msra.mxu0 0.0
  %80 = vmatprep.subr.mxu0 0.0
  %81 = vmatpush1.msra.mxu0 0.0
  %82 = vmatprep.subr.mxu0 0.0
  %83 = vmatpush1.msra.mxu0 0.0
  %84 = vmatprep.subr.mxu0 0.0
  %85 = vmatpush1.msra.mxu0 0.0
  %86 = vmatprep.subr.mxu0 0.0
  %87 = vmatpush1.msra.mxu0 0.0
  %88 = vmatprep.subr.mxu0 0.0
  %89 = vmatpush1.msra.mxu0 0.0
  %90 = vmatprep.subr.mxu0 0.0
  %91 = vmatpush1.msra.mxu0 0.0
  %92 = vmatprep.subr.mxu0 0.0
  %93 = vmatpush1.msra.mxu0 0.0
  %94 = vmatprep.subr.mxu0 0.0
  %95 = vmatpush1.msra.mxu0 %v44
  %96 = vmatprep.subr.mxu0 0.0
  %97 = vmatpush1.msra.mxu0 %v43
  %98 = vmatprep.subr.mxu0 0.0
  %99 = vmatpush1.msra.mxu0 %v42
  %100 = vmatprep.subr.mxu0 0.0
  %101 = vmatpush1.msra.mxu0 %v41
  %102 = vmatprep.subr.mxu0 0.0
  %103 = vmatpush2.msra.mxu0 0.0
  %104 = vmatprep.subr.mxu0 0.0
  %105 = vmatpush2.msra.mxu0 0.0
  %106 = vmatprep.subr.mxu0 0.0
  %107 = vmatpush2.msra.mxu0 0.0
  %108 = vmatprep.subr.mxu0 0.0
  %109 = vmatpush2.msra.mxu0 0.0
  %110 = vmatprep.subr.mxu0 0.0
  %111 = vmatpush2.msra.mxu0 0.0
  %112 = vmatprep.subr.mxu0 0.0
  %113 = vmatpush2.msra.mxu0 0.0
  %114 = vmatprep.subr.mxu0 0.0
  %115 = vmatpush2.msra.mxu0 0.0
  %116 = vmatprep.subr.mxu0 0.0
  %117 = vmatpush2.msra.mxu0 0.0
  %118 = vmatprep.subr.mxu0 0.0
  %119 = vmatpush2.msra.mxu0 0.0
  %120 = vmatprep.subr.mxu0 0.0
  %121 = vmatpush2.msra.mxu0 0.0
  %122 = vmatprep.subr.mxu0 0.0
  %123 = vmatpush2.msra.mxu0 0.0
  %124 = vmatprep.subr.mxu0 0.0
  %125 = vmatpush2.msra.mxu0 0.0
  %126 = vmatprep.subr.mxu0 0.0
  %127 = vmatpush2.msra.mxu0 0.0
  %128 = vmatprep.subr.mxu0 0.0
  %129 = vmatpush2.msra.mxu0 0.0
  %130 = vmatprep.subr.mxu0 0.0
  %131 = vmatpush2.msra.mxu0 0.0
  %132 = vmatprep.subr.mxu0 0.0
  %133 = vmatpush2.msra.mxu0 0.0
  %134 = vmatprep.mubr.f32.mxu0 0.0
  %135 = vmatmul.mubr.f32.gmra.mxu0 %v62
  %v136 = vpop.f32.mrf.mxu0
  %v137 = vadd.f32 %v50, %v136
  %v138 = vpop.f32.mrf.mxu0
  %139 = vmatprep.mubr.f32.mxu0 0.0
  %140 = vmatmul.mubr.f32.gmra.mxu0 %v64
  %v141 = vpop.f32.mrf.mxu0
  %v142 = vadd.f32 %v52, %v141
  %v143 = vpop.f32.mrf.mxu0
  %144 = vmatprep.mubr.f32.mxu0 0.0
  %145 = vmatmul.mubr.f32.gmra.mxu0 %v66
  %v146 = vpop.f32.mrf.mxu0
  %v147 = vadd.f32 %v54, %v146
  %v148 = vpop.f32.mrf.mxu0
  %149 = vmatprep.mubr.f32.mxu0 0.0
  %150 = vmatmul.mubr.f32.gmra.mxu0 %v68
  %v151 = vpop.f32.mrf.mxu0
  %v152 = vadd.f32 %v56, %v151
  %v153 = vpop.f32.mrf.mxu0
  %154 = vdwg.mxu0
  %155 = vst.msk [vmem:[%s2] sm:$0xff] %vm40, %v137
  %156 = vst.msk [vmem:[%s2 + $0x8] sm:$0xff] %vm40, %v142
  %157 = vst.msk [vmem:[%s2 + $0x10] sm:$0xff] %vm40, %v147
  %vm158 = vcmask 128000
  %159 = vst.msk [vmem:[%s2 + $0x18] sm:$0x3f] %vm158, %v152
  %164 = vrot.lane.b32.xlu0 %v137, 112
  %v165 = vpop.permute.xlu0 %164
  %166 = vrot.lane.b32.xlu0 %v142, 112
  %v167 = vpop.permute.xlu0 %166
  %168 = vrot.lane.b32.xlu0 %v147, 112
  %v169 = vpop.permute.xlu0 %168
  %170 = vrot.lane.b32.xlu0 %v152, 112
  %v171 = vpop.permute.xlu0 %170
  %s176 = scalar_lea.vmem %s2, 32
  %177 = vst.msk [vmem:[%s176] sm:$0xff] %vm40, %v165
  %178 = vst.msk [vmem:[%s176 + $0x8] sm:$0xff] %vm40, %v167
  %179 = vst.msk [vmem:[%s176 + $0x10] sm:$0xff] %vm40, %v169
  %180 = vst.msk [vmem:[%s176 + $0x18] sm:$0x3f] %vm158, %v171
  // Predicated region
  $region10: #{adaptor_forward.1} parent=0 // pred_check
    _
  $region11: #{adaptor_forward.1} parent=0 // pred_check_branch
    %182 = sbr.rel (0) target = $region13
  $region12: #{adaptor_forward.1} parent=0 // pred_region
    _
  $region13: #{adaptor_forward.1} parent=0 // pred_fallthru
    _
  // Predicated region
  $region14: #{adaptor_forward.1} parent=0 // pred_check
    _
  $region15: #{adaptor_forward.1} parent=0 // pred_check_branch
    %184 = sbr.rel (0) target = $region17
  $region16: #{adaptor_forward.1} parent=0 // pred_region
    _
  $region17: #{adaptor_forward.1} parent=0 // pred_fallthru
    _

</llo_original>
